<compile_context>
chip_gen: v5e
topology: v5e:2x2
jax: 0.10.0
libtpu: 0.0.40
codegen_flags: <defaults>
</compile_context>

<pallas_src>
import functools

import jax
import jax.numpy as jnp
from jax.experimental import pallas as pl
from jax.experimental.pallas import tpu as pltpu


def _vmem_budget():
    """Per-generation scoped-VMEM limit and per-block byte budget."""
    cap = None
    try:
        cap = getattr(pltpu.get_tpu_info(), "vmem_capacity_bytes", None)
    except Exception:
        cap = None
    if not cap:
        cap = 64 * 1024 * 1024          # conservative fallback: v7x per-TC physical VMEM
    # ~75% of physical as the scoped limit, capped at 96 MiB (v5e/v6e -> 96, v7x -> 48).
    limit = min(96 * 1024 * 1024, (int(cap) * 3) // 4)
    # in + out double-buffered = 4 live blocks; keep ~20% slack for temporaries/internals.
    block = min(16 * 1024 * 1024, limit // 5)
    return int(limit), int(block)


# ---------------- kernels ----------------


def _fused_normalize_kernel(x_ref, o_ref):
    # Block view: (tp, cols) -- whole planes per row; full-cols block, no column tail.
    x = x_ref[...]
    m = jnp.max(x, axis=1, keepdims=True).astype(jnp.float32)   # (tp, 1), exact in x dtype
    m = jnp.where(m == 0.0, 1.0, m)                             # max==0 -> 1
    inv = (1.0 / m).astype(o_ref.dtype)                         # exact per-row reciprocal
    o_ref[...] = (x * inv).astype(o_ref.dtype)


def _row_max_kernel(x_ref, m_ref, acc_ref, *, tl, cols, mask_cols):
    # Grid: (row tiles, col tiles); col axis is the reduction ('arbitrary', innermost).
    k = pl.program_id(1)
    x = x_ref[...]
    if mask_cols:
        # Last column block may overhang the array: mask tail lanes to -inf so garbage
        # (and all-negative planes) never corrupt the max.
        col = k * tl + jax.lax.broadcasted_iota(jnp.int32, x.shape, 1)
        x = jnp.where(col < cols, x, jnp.asarray(-jnp.inf, dtype=x.dtype))
    tile_max = jnp.max(x, axis=1, keepdims=True).astype(jnp.float32)

    @pl.when(k == 0)
    def _init():
        acc_ref[...] = tile_max

    @pl.when(k > 0)
    def _accum():
        acc_ref[...] = jnp.maximum(acc_ref[...], tile_max)

    @pl.when(k == pl.num_programs(1) - 1)
    def _flush():
        m_ref[...] = acc_ref[...]          # single write per row tile (no per-step vst.msk)


def _apply_norm_kernel(x_ref, m_ref, o_ref):
    m = m_ref[...]                         # (tp, 1) per-plane max, f32
    m = jnp.where(m == 0.0, 1.0, m)
    inv = (1.0 / m).astype(o_ref.dtype)    # exact reciprocal (no approx: 1e-6 tolerance)
    o_ref[...] = (x_ref[...] * inv).astype(o_ref.dtype)


# ---------------- wrapper ----------------


def normalize_spec(spectrogram: jax.Array, *, block_bytes: int | None = None) -> jax.Array:
    """Pallas equivalent of NormalizeSpec.forward.

    Args:
      spectrogram: (nb_samples, nb_channels, nb_bins, nb_frames)
      block_bytes: optional override of the per-block byte budget (testing only).
    Returns:
      spectrogram divided by its per-(sample, channel) max (max==0 treated as 1),
      same shape and dtype.
    """
    n, c, b, f = spectrogram.shape
    rows, cols = n * c, b * f
    dtype = spectrogram.dtype
    itemsize = jnp.dtype(dtype).itemsize
    x2 = spectrogram.reshape(rows, cols)

    vmem_limit, auto_block = _vmem_budget()
    block_budget = int(block_bytes) if block_bytes is not None else auto_block

    row_bytes = cols * itemsize
    tp_min = 8 if rows >= 8 else rows      # minimum legal row-tile (8-multiple or full dim)

    if tp_min * row_bytes <= block_budget:
        # -------- fused single pass: 1x read + 1x write of HBM --------
        if rows < 8:
            tp = rows                                           # full-extent row block
        else:
            tp_cap = max(8, ((block_budget // row_bytes) // 8) * 8)
            # Aim for >= 4 row blocks (pipelining + v7x megacore), never below 8 rows.
            tp_target = max(8, ((pl.cdiv(rows, 4) + 7) // 8) * 8)
            tp = min(tp_cap, tp_target)
        grid_r = pl.cdiv(rows, tp)

        out = pl.pallas_call(
            _fused_normalize_kernel,
            out_shape=jax.ShapeDtypeStruct((rows, cols), dtype),
            grid=(grid_r,),
            in_specs=[pl.BlockSpec((tp, cols), lambda i: (i, 0))],
            out_specs=pl.BlockSpec((tp, cols), lambda i: (i, 0)),
            compiler_params=pltpu.CompilerParams(
                dimension_semantics=("parallel",),
                vmem_limit_bytes=vmem_limit,
            ),
        )(x2)
        return out.reshape(n, c, b, f)

    # -------- two-pass path: planes too large for a single VMEM block --------
    tp = tp_min
    tl = max(128, ((block_budget // max(1, tp * itemsize)) // 128) * 128)
    tl = min(tl, ((cols + 127) // 128) * 128)
    grid_r = pl.cdiv(rows, tp)
    grid_c = pl.cdiv(cols, tl)
    mask_cols = (cols % tl) != 0

    # Pass 1: per-plane max, scratch-accumulated across the column (frames) grid axis.
    row_max = pl.pallas_call(
        functools.partial(_row_max_kernel, tl=tl, cols=cols, mask_cols=mask_cols),
        out_shape=jax.ShapeDtypeStruct((rows, 1), jnp.float32),
        grid=(grid_r, grid_c),
        in_specs=[pl.BlockSpec((tp, tl), lambda i, k: (i, k))],
        out_specs=pl.BlockSpec((tp, 1), lambda i, k: (i, 0)),
        scratch_shapes=[pltpu.VMEM((tp, 1), jnp.float32)],
        compiler_params=pltpu.CompilerParams(
            dimension_semantics=("parallel", "arbitrary"),
            vmem_limit_bytes=vmem_limit,
        ),
    )(x2)

    # Pass 2: lane-dense tiles * broadcast reciprocal of the per-plane max.
    out = pl.pallas_call(
        _apply_norm_kernel,
        out_shape=jax.ShapeDtypeStruct((rows, cols), dtype),
        grid=(grid_r, grid_c),
        in_specs=[
            pl.BlockSpec((tp, tl), lambda i, j: (i, j)),
            pl.BlockSpec((tp, 1), lambda i, j: (i, 0)),
        ],
        out_specs=pl.BlockSpec((tp, tl), lambda i, j: (i, j)),
        compiler_params=pltpu.CompilerParams(
            dimension_semantics=("parallel", "parallel"),
            vmem_limit_bytes=vmem_limit,
        ),
    )(x2, row_max)
    return out.reshape(n, c, b, f)


def _reference(spectrogram: jax.Array) -> jax.Array:
    # Pure-JAX reference mirroring the PyTorch semantics.
    mx = jnp.max(spectrogram, axis=(2, 3), keepdims=True)
    mx = jnp.where(mx == 0, jnp.ones_like(mx), mx)
    return spectrogram / mx


def _check(x, y):
    y_ref = _reference(x)
    assert y.shape == x.shape and y.dtype == x.dtype
    assert jnp.allclose(y, y_ref, atol=1e-6, rtol=1e-6)


if __name__ == "__main__":
    key = jax.random.PRNGKey(0)
    k1, k2, k3, k4 = jax.random.split(key, 4)

    # Test 1: canonical small shape -> fused single-pass path; exercises max==0 -> 1.
    x = jax.random.uniform(k1, (2, 4, 16, 16), dtype=jnp.float32)
    x = x.at[1, 2].set(0.0)
    _check(x, jax.block_until_ready(normalize_spec(x)))

    # Test 2: ragged cols (17*40 = 680, not a 128 multiple) + tiny forced block budget
    # -> two-pass path with masked column tail; all-negative and all-zero planes.
    xb = jax.random.normal(k2, (2, 3, 17, 40), dtype=jnp.float32)
    xb = xb.at[0, 1].set(-jnp.abs(xb[0, 1]) - 1.0)
    xb = xb.at[1, 0].set(0.0)
    _check(xb, jax.block_until_ready(normalize_spec(xb, block_bytes=4096)))

    # Test 3: fused path with a ragged row tail (rows=12 -> tp=8, grid_r=2) and
    # non-128-multiple cols (17*15 = 255) in a full-extent column block.
    xc = jax.random.normal(k3, (3, 4, 17, 15), dtype=jnp.float32)
    xc = xc.at[2, 3].set(0.0)
    _check(xc, jax.block_until_ready(normalize_spec(xc)))

    # Test 4: two-pass path with evenly dividing column tiles and a ragged row tail
    # (rows=10 -> tp=8, grid_r=2; cols=2048 -> tl=1024, grid_c=2).
    xd = jax.random.normal(k4, (5, 2, 16, 128), dtype=jnp.float32)
    xd = xd.at[4, 1].set(0.0)
    _check(xd, jax.block_until_ready(normalize_spec(xd, block_bytes=32768)))

    print("KERNEL_OK")
</pallas_src>

<mosaic_0001>
module attributes {stable_mosaic.version = 11 : i64} {
  func.func @_fused_normalize_kernel(%arg0: i32, %arg1: memref<8x256xf32, #tpu.memory_space<vmem>>, %arg2: memref<8x256xf32, #tpu.memory_space<vmem>>) attributes {dimension_semantics = [#tpu.dimension_semantics<parallel>], iteration_bounds = array<i64: 1>, scalar_prefetch = 0 : i64, scratch_operands = 0 : i64, tpu.core_type = #tpu.core_type<tc>, window_params = [{transform_indices = @transform_0, window_bounds = array<i64: 8, 256>}, {transform_indices = @transform_1, window_bounds = array<i64: 8, 256>}]} {
    %c0 = arith.constant 0 : index
    %c0_0 = arith.constant 0 : index
    %0 = vector.load %arg1[%c0, %c0_0] : memref<8x256xf32, #tpu.memory_space<vmem>>, vector<8x256xf32>
    %cst = arith.constant dense<0xFF800000> : vector<8xf32>
    %1 = vector.multi_reduction <maximumf>, %0, %cst [1] : vector<8x256xf32> to vector<8xf32>
    %2 = vector.shape_cast %1 : vector<8xf32> to vector<8x1xf32>
    %cst_1 = arith.constant 0.000000e+00 : f32
    %3 = vector.broadcast %cst_1 : f32 to vector<8x1xf32>
    %4 = arith.cmpf oeq, %2, %3 : vector<8x1xf32>
    %cst_2 = arith.constant 1.000000e+00 : f32
    %5 = vector.broadcast %cst_2 : f32 to vector<8x1xf32>
    %6 = arith.select %4, %5, %2 : vector<8x1xi1>, vector<8x1xf32>
    %cst_3 = arith.constant 1.000000e+00 : f32
    %7 = vector.broadcast %cst_3 : f32 to vector<8x1xf32>
    %8 = arith.divf %7, %6 : vector<8x1xf32>
    %9 = vector.broadcast %8 : vector<8x1xf32> to vector<8x256xf32>
    %10 = arith.mulf %0, %9 : vector<8x256xf32>
    %c0_4 = arith.constant 0 : index
    %c0_5 = arith.constant 0 : index
    %11 = vector.load %arg2[%c0_4, %c0_5] : memref<8x256xf32, #tpu.memory_space<vmem>>, vector<8x256xf32>
    tpu.vector_store %arg2[%c0_4, %c0_5], %10 {strides = array<i32>} : memref<8x256xf32, #tpu.memory_space<vmem>>, vector<8x256xf32>,
    return
  }
  func.func @transform_0(%arg0: i32) -> (i32, i32) {
    %c0_i32 = arith.constant 0 : i32
    %c0_i32_0 = arith.constant 0 : i32
    return %arg0, %c0_i32 : i32, i32
  }
  func.func @transform_1(%arg0: i32) -> (i32, i32) {
    %c0_i32 = arith.constant 0 : i32
    %c0_i32_0 = arith.constant 0 : i32
    return %arg0, %c0_i32 : i32, i32
  }
}

</mosaic_0001>

<llo_original>
// kernel: tpu_custom_call.1
$region0: #{tpu_custom_call.1}
  #allocation0 [shape = 'u32[]', space=smem, size = 0x4, offset = 0x4, fixed_abs, tag = 'smem constant byte address 0x4 - core index']
  #allocation1 [shape = 'u32[72,128]{1,0:T(1,128)}', space=vmem, size = 0x9000, scoped, tag = 'internal scratch']
  %s0 = inlined_call_operand.hbm [shape: f32[8,256], index: 0, kind: input, shape index: {}]
  %s1 = inlined_call_operand.hbm [shape: f32[8,256], index: 1, kind: output, shape index: {}]
  %s2 = sld [smem:[#allocation0]]
  $region18: #{tpu_custom_call.1} parent=0
    _
  %s4 = ssub.s32 1, %s2
  %s5 = scalar_select 0, %s4, %s2
  $region1: #{tpu_custom_call.1} parent=0
    #allocation2 [shape = 'u8[8192]{0}', space=vmem, size = 0x2000, scoped, tag = 'input window, operand 0, single buffered']
    #allocation3 [shape = 's32[1]{0}', space=sflag, size = 0x4, scoped, tag = 'scoped memory for tpu_custom_call.1']
    #allocation4 [shape = 's32[1]{0}', space=sflag, size = 0x4, scoped, tag = 'scoped memory for tpu_custom_call.1']
    #allocation5 [shape = 'u8[8192]{0}', space=vmem, size = 0x2000, scoped, tag = 'output window, operand 0, single buffered']
    %6 = vsyncpa [#allocation3], 0
    %7 = vsyncpa [#allocation4], 0
    // Predicated region
    $region2: #{tpu_custom_call.1} parent=1 // pred_check
      _
    $region3: #{tpu_custom_call.1} parent=1 // pred_check_branch
      %9 = sbr.rel (0) target = $region5
    $region4: #{tpu_custom_call.1} parent=1 // pred_region
      %11 = vsyncadd [#allocation3], 0
      %s13 = sshll.u32 %s0, 4
      %s14 = int_to_ptr.hbm [resolvable:$true] %s13
      %s15 = sshll.u32 [#allocation2], 4
      %s16 = int_to_ptr.vmem [resolvable:$true] %s15
      %18 = dma.hbm_to_vmem [thread:$0]  %s14, 256, %s16, [#allocation3]
    $region5: #{tpu_custom_call.1} parent=1 // pred_fallthru
      _
    // Predicated region
    $region6: #{tpu_custom_call.1} parent=1 // pred_check
      _
    $region7: #{tpu_custom_call.1} parent=1 // pred_check_branch
      %20 = sbr.rel (0) target = $region9
    $region8: #{tpu_custom_call.1} parent=1 // pred_region
      %22 = dma.done [#allocation3], 256
    $region9: #{tpu_custom_call.1} parent=1 // pred_fallthru
      _
    %v23 = vld [vmem:[#allocation2] sm:$0xff]
    %v24 = vld [vmem:[#allocation2 + $0x8] sm:$0xff]
    %v25 = vmax.f32 %v23, %v24
    %26 = vmax.xlane.f32.xlu0 %v25
    %v27 = vpop.xlane.xlu0 %26
    %vm28 = vcmp.eq.f32.partialorder %v27, 0.0
    %v29 = vsel %vm28, 1.0, %v27
    %v30 = vrcp.pop %v29
    %v31 = vmul.f32 %v29, %v30
    %v32 = vsub.f32 1.0, %v31
    %v33 = vmul.f32 %v30, %v32
    %v34 = vadd.f32 %v30, %v33
    %vm35 = vweird.f32 %v29
    %vm36 = vweird.f32 %v30
    %vm37 = vmor %vm35, %vm36
    %v38 = vsel %vm37, %v30, %v34
    %v39 = vand.u32 2147483647, %v29
    %vm40 = vcmp.eq.f32.partialorder %v39, 8.507059e+37
    %v41 = vand.u32 %v29, 2147483648
    %v42 = vor.u32 1.1754944e-38, %v41
    %v43 = vsel %vm40, %v42, %v38
    %v44 = vmul.f32 1.0, %v43
    %v45 = vmul.f32 %v23, %v44
    %v46 = vmul.f32 %v24, %v44
    %47 = vst [vmem:[#allocation5] sm:$0xff] %v45
    %48 = vst [vmem:[#allocation5 + $0x8] sm:$0xff] %v46
    // Predicated region
    $region10: #{tpu_custom_call.1} parent=1 // pred_check
      _
    $region11: #{tpu_custom_call.1} parent=1 // pred_check_branch
      %50 = sbr.rel (0) target = $region13
    $region12: #{tpu_custom_call.1} parent=1 // pred_region
      %52 = vsyncadd [#allocation4], 0
      %s54 = sshll.u32 [#allocation5], 4
      %s55 = int_to_ptr.vmem [resolvable:$true] %s54
      %s56 = sshll.u32 %s1, 4
      %s57 = int_to_ptr.hbm [resolvable:$true] %s56
      %59 = dma.vmem_to_hbm [thread:$0]  %s55, 256, %s57, [#allocation4]
    $region13: #{tpu_custom_call.1} parent=1 // pred_fallthru
      _
    // Predicated region
    $region14: #{tpu_custom_call.1} parent=1 // pred_check
      _
    $region15: #{tpu_custom_call.1} parent=1 // pred_check_branch
      %61 = sbr.rel (0) target = $region17
    $region16: #{tpu_custom_call.1} parent=1 // pred_region
      %63 = dma.done [#allocation4], 256
    $region17: #{tpu_custom_call.1} parent=1 // pred_fallthru
      _
    %64 = vsyncpa [#allocation3], 1
    %65 = vsyncpa [#allocation4], 1

</llo_original>
